<compile_context>
chip_gen: v7x
topology: tpu7x:2x2x1
jax: 0.10.0
libtpu: 0.0.40
codegen_flags: <defaults>
</compile_context>

<pallas_src>
import jax
import jax.numpy as jnp
from jax.experimental import pallas as pl
from jax.experimental.pallas import tpu as pltpu

_BN_EPS = 1e-5


def _make_fused_kernel(num_layers):
    """Build a fused kernel for `num_layers` MLPblocks.

    Ref layout: (x_ref, w0_ref, p0_ref, w1_ref, p1_ref, ..., o_ref)
      x_ref : (N, Din0)
      w_ref : (Din, Dout)      Linear weight, pre-transposed (y = x @ W)
      p_ref : (4, Dout)        rows = [gamma1, beta1, gamma2, beta2]
      o_ref : (N, Dout_last)
    Batch statistics need the full batch, so the whole batch lives in VMEM.
    """

    def kernel(*refs):
        x_ref = refs[0]
        o_ref = refs[-1]
        layer_refs = refs[1:-1]

        h = x_ref[...].astype(jnp.float32)
        for l in range(num_layers):
            w = layer_refs[2 * l][...].astype(jnp.float32)        # (Din, Dout)
            p = layer_refs[2 * l + 1][...].astype(jnp.float32)    # (4, Dout)
            g1, b1 = p[0:1, :], p[1:2, :]
            g2, b2 = p[2:3, :], p[3:4, :]

            # Linear (MXU). Bias omitted: it cancels in the training-mode BN.
            y = jnp.dot(h, w, preferred_element_type=jnp.float32)

            # BatchNorm1d #1 (training mode): one-pass stats, fused scale/shift.
            m1 = jnp.mean(y, axis=0, keepdims=True)
            v1 = jnp.maximum(jnp.mean(y * y, axis=0, keepdims=True) - m1 * m1, 0.0)
            s1 = g1 * jax.lax.rsqrt(v1 + _BN_EPS)
            z = y * s1 + (b1 - m1 * s1)

            # ReLU
            r = jnp.maximum(z, 0.0)

            # BatchNorm1d #2
            m2 = jnp.mean(r, axis=0, keepdims=True)
            v2 = jnp.maximum(jnp.mean(r * r, axis=0, keepdims=True) - m2 * m2, 0.0)
            s2 = g2 * jax.lax.rsqrt(v2 + _BN_EPS)
            h = r * s2 + (b2 - m2 * s2)

        o_ref[...] = h.astype(o_ref.dtype)

    return kernel


def multi_mlp_forward(x, weights, bn_params):
    """MultiMLPblock.forward: one fused pallas_call for the whole stack."""
    num_layers = len(weights)
    n = x.shape[0]
    dout = weights[-1].shape[1]

    vmem = pl.BlockSpec(memory_space=pltpu.MemorySpace.VMEM)
    inputs = [x]
    for w, p in zip(weights, bn_params):
        inputs.extend((w, p))

    # TODO(synk): for large batches, tile the batch axis with a two-pass BN
    # (accumulate per-feature sum/sumsq in VMEM scratch via pl.when init, then
    # normalize) instead of this whole-batch-in-one-block design; budget tiles
    # against 64 MiB VMEM on v7x.
    return pl.pallas_call(
        _make_fused_kernel(num_layers),
        out_shape=jax.ShapeDtypeStruct((n, dout), x.dtype),
        in_specs=[vmem] * len(inputs),
        out_specs=vmem,
    )(*inputs)


multi_mlp_forward_jit = jax.jit(multi_mlp_forward)


def init_multi_mlp_params(key, input_dim, output_dim, middle_neurons):
    """Deterministic parameter init mirroring MultiMLPblock.__init__.

    Linear.weight ~ U(-0.1, 0.1)  (MLPinit)
    Linear.bias   ~ U(-1/sqrt(fan_in), 1/sqrt(fan_in))  (PyTorch default;
                    only used by the pure-JAX reference -- it is a no-op
                    before the training-mode BN, so the kernel drops it)
    BatchNorm1d:  gamma = 1, beta = 0  (packed as rows of a (4, Dout) array)
    """
    dims = [input_dim] + list(middle_neurons) + [output_dim]
    weights, biases, bn_params = [], [], []
    for i in range(len(dims) - 1):
        din, dout = dims[i], dims[i + 1]
        key, kw, kb = jax.random.split(key, 3)
        w = jax.random.uniform(kw, (din, dout), jnp.float32, minval=-0.1, maxval=0.1)
        bound = 1.0 / jnp.sqrt(jnp.float32(din))
        b = jax.random.uniform(kb, (1, dout), jnp.float32, minval=-bound, maxval=bound)
        packed = jnp.concatenate(
            [
                jnp.ones((1, dout), jnp.float32),   # gamma1
                jnp.zeros((1, dout), jnp.float32),  # beta1
                jnp.ones((1, dout), jnp.float32),   # gamma2
                jnp.zeros((1, dout), jnp.float32),  # beta2
            ],
            axis=0,
        )
        weights.append(w)
        biases.append(b)
        bn_params.append(packed)
    return weights, biases, bn_params


def _reference_forward(x, weights, biases, bn_params):
    """Pure-JAX reference matching the original PyTorch module (bias kept)."""
    out = x
    for w, b, p in zip(weights, biases, bn_params):
        g1, be1, g2, be2 = p[0:1], p[1:2], p[2:3], p[3:4]
        y = out @ w + b  # bias kept here; it cancels inside the training-mode BN
        m1 = y.mean(axis=0, keepdims=True)
        v1 = ((y - m1) ** 2).mean(axis=0, keepdims=True)
        z = (y - m1) / jnp.sqrt(v1 + _BN_EPS) * g1 + be1
        r = jnp.maximum(z, 0.0)
        m2 = r.mean(axis=0, keepdims=True)
        v2 = ((r - m2) ** 2).mean(axis=0, keepdims=True)
        out = (r - m2) / jnp.sqrt(v2 + _BN_EPS) * g2 + be2
    return out


if __name__ == "__main__":
    key = jax.random.PRNGKey(0)
    key, kx = jax.random.split(key)

    # MultiMLPblock(input_dim=32, output_dim=16, middle_neurons=[64, 48])
    # -> dims 32 -> 64 -> 48 -> 16, batch of 8 rows (BatchNorm1d needs batch > 1).
    batch, input_dim, output_dim = 8, 32, 16
    middle_neurons = [64, 48]

    x = jax.random.normal(kx, (batch, input_dim), jnp.float32)
    weights, biases, bn_params = init_multi_mlp_params(
        key, input_dim, output_dim, middle_neurons
    )

    out = multi_mlp_forward_jit(x, weights, bn_params)
    out = jax.block_until_ready(out)

    ref = _reference_forward(x, weights, biases, bn_params)
    assert out.shape == (batch, output_dim), out.shape
    assert jnp.allclose(out, ref, atol=1e-4, rtol=1e-4), "mismatch vs reference"

    print("KERNEL_OK")
</pallas_src>

<mosaic_0001>
module attributes {stable_mosaic.version = 11 : i64} {
  func.func @kernel(%arg0: memref<8x32xf32, #tpu.memory_space<vmem>>, %arg1: memref<32x64xf32, #tpu.memory_space<vmem>>, %arg2: memref<4x64xf32, #tpu.memory_space<vmem>>, %arg3: memref<64x48xf32, #tpu.memory_space<vmem>>, %arg4: memref<4x48xf32, #tpu.memory_space<vmem>>, %arg5: memref<48x16xf32, #tpu.memory_space<vmem>>, %arg6: memref<4x16xf32, #tpu.memory_space<vmem>>, %arg7: memref<8x16xf32, #tpu.memory_space<vmem>>) attributes {dimension_semantics = [], scalar_prefetch = 0 : i64, scratch_operands = 0 : i64, tpu.core_type = #tpu.core_type<tc>} {
    %c0 = arith.constant 0 : index
    %c0_0 = arith.constant 0 : index
    %0 = vector.load %arg0[%c0, %c0_0] : memref<8x32xf32, #tpu.memory_space<vmem>>, vector<8x32xf32>
    %c0_1 = arith.constant 0 : index
    %c0_2 = arith.constant 0 : index
    %1 = vector.load %arg1[%c0_1, %c0_2] : memref<32x64xf32, #tpu.memory_space<vmem>>, vector<32x64xf32>
    %c0_3 = arith.constant 0 : index
    %c0_4 = arith.constant 0 : index
    %2 = vector.load %arg2[%c0_3, %c0_4] : memref<4x64xf32, #tpu.memory_space<vmem>>, vector<4x64xf32>
    %3 = vector.extract_strided_slice %2 {offsets = [0, 0], sizes = [1, 64], strides = [1, 1]} : vector<4x64xf32> to vector<1x64xf32>
    %4 = vector.extract_strided_slice %2 {offsets = [1, 0], sizes = [1, 64], strides = [1, 1]} : vector<4x64xf32> to vector<1x64xf32>
    %5 = vector.extract_strided_slice %2 {offsets = [2, 0], sizes = [1, 64], strides = [1, 1]} : vector<4x64xf32> to vector<1x64xf32>
    %6 = vector.extract_strided_slice %2 {offsets = [3, 0], sizes = [1, 64], strides = [1, 1]} : vector<4x64xf32> to vector<1x64xf32>
    %cst = arith.constant dense<0.000000e+00> : vector<8x64xf32>
    %7 = tpu.matmul %0, %1, %cst {dimension_numbers = #tpu.dot_dimension_numbers<[1], [0], [0], [1], [0, 0, 1, 1], [], []>} : vector<8x32xf32>, vector<32x64xf32>, vector<8x64xf32> -> vector<8x64xf32>
    %cst_5 = arith.constant dense<0.000000e+00> : vector<64xf32>
    %8 = vector.multi_reduction <add>, %7, %cst_5 [0] : vector<8x64xf32> to vector<64xf32>
    %9 = vector.shape_cast %8 : vector<64xf32> to vector<1x64xf32>
    %cst_6 = arith.constant 8.000000e+00 : f32
    %10 = vector.broadcast %cst_6 : f32 to vector<1x64xf32>
    %11 = arith.divf %9, %10 : vector<1x64xf32>
    %12 = arith.mulf %7, %7 : vector<8x64xf32>
    %cst_7 = arith.constant dense<0.000000e+00> : vector<64xf32>
    %13 = vector.multi_reduction <add>, %12, %cst_7 [0] : vector<8x64xf32> to vector<64xf32>
    %14 = vector.shape_cast %13 : vector<64xf32> to vector<1x64xf32>
    %cst_8 = arith.constant 8.000000e+00 : f32
    %15 = vector.broadcast %cst_8 : f32 to vector<1x64xf32>
    %16 = arith.divf %14, %15 : vector<1x64xf32>
    %17 = arith.mulf %11, %11 : vector<1x64xf32>
    %18 = arith.subf %16, %17 : vector<1x64xf32>
    %cst_9 = arith.constant 0.000000e+00 : f32
    %19 = vector.broadcast %cst_9 : f32 to vector<1x64xf32>
    %20 = arith.maximumf %18, %19 : vector<1x64xf32>
    %cst_10 = arith.constant 9.99999974E-6 : f32
    %21 = vector.broadcast %cst_10 : f32 to vector<1x64xf32>
    %22 = arith.addf %20, %21 : vector<1x64xf32>
    %23 = math.rsqrt %22 : vector<1x64xf32>
    %24 = arith.mulf %3, %23 : vector<1x64xf32>
    %25 = vector.broadcast %24 : vector<1x64xf32> to vector<8x64xf32>
    %26 = arith.mulf %7, %25 : vector<8x64xf32>
    %27 = arith.mulf %11, %24 : vector<1x64xf32>
    %28 = arith.subf %4, %27 : vector<1x64xf32>
    %29 = vector.broadcast %28 : vector<1x64xf32> to vector<8x64xf32>
    %30 = arith.addf %26, %29 : vector<8x64xf32>
    %cst_11 = arith.constant 0.000000e+00 : f32
    %31 = vector.broadcast %cst_11 : f32 to vector<8x64xf32>
    %32 = arith.maximumf %30, %31 : vector<8x64xf32>
    %cst_12 = arith.constant dense<0.000000e+00> : vector<64xf32>
    %33 = vector.multi_reduction <add>, %32, %cst_12 [0] : vector<8x64xf32> to vector<64xf32>
    %34 = vector.shape_cast %33 : vector<64xf32> to vector<1x64xf32>
    %cst_13 = arith.constant 8.000000e+00 : f32
    %35 = vector.broadcast %cst_13 : f32 to vector<1x64xf32>
    %36 = arith.divf %34, %35 : vector<1x64xf32>
    %37 = arith.mulf %32, %32 : vector<8x64xf32>
    %cst_14 = arith.constant dense<0.000000e+00> : vector<64xf32>
    %38 = vector.multi_reduction <add>, %37, %cst_14 [0] : vector<8x64xf32> to vector<64xf32>
    %39 = vector.shape_cast %38 : vector<64xf32> to vector<1x64xf32>
    %cst_15 = arith.constant 8.000000e+00 : f32
    %40 = vector.broadcast %cst_15 : f32 to vector<1x64xf32>
    %41 = arith.divf %39, %40 : vector<1x64xf32>
    %42 = arith.mulf %36, %36 : vector<1x64xf32>
    %43 = arith.subf %41, %42 : vector<1x64xf32>
    %cst_16 = arith.constant 0.000000e+00 : f32
    %44 = vector.broadcast %cst_16 : f32 to vector<1x64xf32>
    %45 = arith.maximumf %43, %44 : vector<1x64xf32>
    %cst_17 = arith.constant 9.99999974E-6 : f32
    %46 = vector.broadcast %cst_17 : f32 to vector<1x64xf32>
    %47 = arith.addf %45, %46 : vector<1x64xf32>
    %48 = math.rsqrt %47 : vector<1x64xf32>
    %49 = arith.mulf %5, %48 : vector<1x64xf32>
    %50 = vector.broadcast %49 : vector<1x64xf32> to vector<8x64xf32>
    %51 = arith.mulf %32, %50 : vector<8x64xf32>
    %52 = arith.mulf %36, %49 : vector<1x64xf32>
    %53 = arith.subf %6, %52 : vector<1x64xf32>
    %54 = vector.broadcast %53 : vector<1x64xf32> to vector<8x64xf32>
    %55 = arith.addf %51, %54 : vector<8x64xf32>
    %c0_18 = arith.constant 0 : index
    %c0_19 = arith.constant 0 : index
    %56 = vector.load %arg3[%c0_18, %c0_19] : memref<64x48xf32, #tpu.memory_space<vmem>>, vector<64x48xf32>
    %c0_20 = arith.constant 0 : index
    %c0_21 = arith.constant 0 : index
    %57 = vector.load %arg4[%c0_20, %c0_21] : memref<4x48xf32, #tpu.memory_space<vmem>>, vector<4x48xf32>
    %58 = vector.extract_strided_slice %57 {offsets = [0, 0], sizes = [1, 48], strides = [1, 1]} : vector<4x48xf32> to vector<1x48xf32>
    %59 = vector.extract_strided_slice %57 {offsets = [1, 0], sizes = [1, 48], strides = [1, 1]} : vector<4x48xf32> to vector<1x48xf32>
    %60 = vector.extract_strided_slice %57 {offsets = [2, 0], sizes = [1, 48], strides = [1, 1]} : vector<4x48xf32> to vector<1x48xf32>
    %61 = vector.extract_strided_slice %57 {offsets = [3, 0], sizes = [1, 48], strides = [1, 1]} : vector<4x48xf32> to vector<1x48xf32>
    %cst_22 = arith.constant dense<0.000000e+00> : vector<8x48xf32>
    %62 = tpu.matmul %55, %56, %cst_22 {dimension_numbers = #tpu.dot_dimension_numbers<[1], [0], [0], [1], [0, 0, 1, 1], [], []>} : vector<8x64xf32>, vector<64x48xf32>, vector<8x48xf32> -> vector<8x48xf32>
    %cst_23 = arith.constant dense<0.000000e+00> : vector<48xf32>
    %63 = vector.multi_reduction <add>, %62, %cst_23 [0] : vector<8x48xf32> to vector<48xf32>
    %64 = vector.shape_cast %63 : vector<48xf32> to vector<1x48xf32>
    %cst_24 = arith.constant 8.000000e+00 : f32
    %65 = vector.broadcast %cst_24 : f32 to vector<1x48xf32>
    %66 = arith.divf %64, %65 : vector<1x48xf32>
    %67 = arith.mulf %62, %62 : vector<8x48xf32>
    %cst_25 = arith.constant dense<0.000000e+00> : vector<48xf32>
    %68 = vector.multi_reduction <add>, %67, %cst_25 [0] : vector<8x48xf32> to vector<48xf32>
    %69 = vector.shape_cast %68 : vector<48xf32> to vector<1x48xf32>
    %cst_26 = arith.constant 8.000000e+00 : f32
    %70 = vector.broadcast %cst_26 : f32 to vector<1x48xf32>
    %71 = arith.divf %69, %70 : vector<1x48xf32>
    %72 = arith.mulf %66, %66 : vector<1x48xf32>
    %73 = arith.subf %71, %72 : vector<1x48xf32>
    %cst_27 = arith.constant 0.000000e+00 : f32
    %74 = vector.broadcast %cst_27 : f32 to vector<1x48xf32>
    %75 = arith.maximumf %73, %74 : vector<1x48xf32>
    %cst_28 = arith.constant 9.99999974E-6 : f32
    %76 = vector.broadcast %cst_28 : f32 to vector<1x48xf32>
    %77 = arith.addf %75, %76 : vector<1x48xf32>
    %78 = math.rsqrt %77 : vector<1x48xf32>
    %79 = arith.mulf %58, %78 : vector<1x48xf32>
    %80 = vector.broadcast %79 : vector<1x48xf32> to vector<8x48xf32>
    %81 = arith.mulf %62, %80 : vector<8x48xf32>
    %82 = arith.mulf %66, %79 : vector<1x48xf32>
    %83 = arith.subf %59, %82 : vector<1x48xf32>
    %84 = vector.broadcast %83 : vector<1x48xf32> to vector<8x48xf32>
    %85 = arith.addf %81, %84 : vector<8x48xf32>
    %cst_29 = arith.constant 0.000000e+00 : f32
    %86 = vector.broadcast %cst_29 : f32 to vector<8x48xf32>
    %87 = arith.maximumf %85, %86 : vector<8x48xf32>
    %cst_30 = arith.constant dense<0.000000e+00> : vector<48xf32>
    %88 = vector.multi_reduction <add>, %87, %cst_30 [0] : vector<8x48xf32> to vector<48xf32>
    %89 = vector.shape_cast %88 : vector<48xf32> to vector<1x48xf32>
    %cst_31 = arith.constant 8.000000e+00 : f32
    %90 = vector.broadcast %cst_31 : f32 to vector<1x48xf32>
    %91 = arith.divf %89, %90 : vector<1x48xf32>
    %92 = arith.mulf %87, %87 : vector<8x48xf32>
    %cst_32 = arith.constant dense<0.000000e+00> : vector<48xf32>
    %93 = vector.multi_reduction <add>, %92, %cst_32 [0] : vector<8x48xf32> to vector<48xf32>
    %94 = vector.shape_cast %93 : vector<48xf32> to vector<1x48xf32>
    %cst_33 = arith.constant 8.000000e+00 : f32
    %95 = vector.broadcast %cst_33 : f32 to vector<1x48xf32>
    %96 = arith.divf %94, %95 : vector<1x48xf32>
    %97 = arith.mulf %91, %91 : vector<1x48xf32>
    %98 = arith.subf %96, %97 : vector<1x48xf32>
    %cst_34 = arith.constant 0.000000e+00 : f32
    %99 = vector.broadcast %cst_34 : f32 to vector<1x48xf32>
    %100 = arith.maximumf %98, %99 : vector<1x48xf32>
    %cst_35 = arith.constant 9.99999974E-6 : f32
    %101 = vector.broadcast %cst_35 : f32 to vector<1x48xf32>
    %102 = arith.addf %100, %101 : vector<1x48xf32>
    %103 = math.rsqrt %102 : vector<1x48xf32>
    %104 = arith.mulf %60, %103 : vector<1x48xf32>
    %105 = vector.broadcast %104 : vector<1x48xf32> to vector<8x48xf32>
    %106 = arith.mulf %87, %105 : vector<8x48xf32>
    %107 = arith.mulf %91, %104 : vector<1x48xf32>
    %108 = arith.subf %61, %107 : vector<1x48xf32>
    %109 = vector.broadcast %108 : vector<1x48xf32> to vector<8x48xf32>
    %110 = arith.addf %106, %109 : vector<8x48xf32>
    %c0_36 = arith.constant 0 : index
    %c0_37 = arith.constant 0 : index
    %111 = vector.load %arg5[%c0_36, %c0_37] : memref<48x16xf32, #tpu.memory_space<vmem>>, vector<48x16xf32>
    %c0_38 = arith.constant 0 : index
    %c0_39 = arith.constant 0 : index
    %112 = vector.load %arg6[%c0_38, %c0_39] : memref<4x16xf32, #tpu.memory_space<vmem>>, vector<4x16xf32>
    %113 = vector.extract_strided_slice %112 {offsets = [0, 0], sizes = [1, 16], strides = [1, 1]} : vector<4x16xf32> to vector<1x16xf32>
    %114 = vector.extract_strided_slice %112 {offsets = [1, 0], sizes = [1, 16], strides = [1, 1]} : vector<4x16xf32> to vector<1x16xf32>
    %115 = vector.extract_strided_slice %112 {offsets = [2, 0], sizes = [1, 16], strides = [1, 1]} : vector<4x16xf32> to vector<1x16xf32>
    %116 = vector.extract_strided_slice %112 {offsets = [3, 0], sizes = [1, 16], strides = [1, 1]} : vector<4x16xf32> to vector<1x16xf32>
    %cst_40 = arith.constant dense<0.000000e+00> : vector<8x16xf32>
    %117 = tpu.matmul %110, %111, %cst_40 {dimension_numbers = #tpu.dot_dimension_numbers<[1], [0], [0], [1], [0, 0, 1, 1], [], []>} : vector<8x48xf32>, vector<48x16xf32>, vector<8x16xf32> -> vector<8x16xf32>
    %cst_41 = arith.constant dense<0.000000e+00> : vector<16xf32>
    %118 = vector.multi_reduction <add>, %117, %cst_41 [0] : vector<8x16xf32> to vector<16xf32>
    %119 = vector.shape_cast %118 : vector<16xf32> to vector<1x16xf32>
    %cst_42 = arith.constant 8.000000e+00 : f32
    %120 = vector.broadcast %cst_42 : f32 to vector<1x16xf32>
    %121 = arith.divf %119, %120 : vector<1x16xf32>
    %122 = arith.mulf %117, %117 : vector<8x16xf32>
    %cst_43 = arith.constant dense<0.000000e+00> : vector<16xf32>
    %123 = vector.multi_reduction <add>, %122, %cst_43 [0] : vector<8x16xf32> to vector<16xf32>
    %124 = vector.shape_cast %123 : vector<16xf32> to vector<1x16xf32>
    %cst_44 = arith.constant 8.000000e+00 : f32
    %125 = vector.broadcast %cst_44 : f32 to vector<1x16xf32>
    %126 = arith.divf %124, %125 : vector<1x16xf32>
    %127 = arith.mulf %121, %121 : vector<1x16xf32>
    %128 = arith.subf %126, %127 : vector<1x16xf32>
    %cst_45 = arith.constant 0.000000e+00 : f32
    %129 = vector.broadcast %cst_45 : f32 to vector<1x16xf32>
    %130 = arith.maximumf %128, %129 : vector<1x16xf32>
    %cst_46 = arith.constant 9.99999974E-6 : f32
    %131 = vector.broadcast %cst_46 : f32 to vector<1x16xf32>
    %132 = arith.addf %130, %131 : vector<1x16xf32>
    %133 = math.rsqrt %132 : vector<1x16xf32>
    %134 = arith.mulf %113, %133 : vector<1x16xf32>
    %135 = vector.broadcast %134 : vector<1x16xf32> to vector<8x16xf32>
    %136 = arith.mulf %117, %135 : vector<8x16xf32>
    %137 = arith.mulf %121, %134 : vector<1x16xf32>
    %138 = arith.subf %114, %137 : vector<1x16xf32>
    %139 = vector.broadcast %138 : vector<1x16xf32> to vector<8x16xf32>
    %140 = arith.addf %136, %139 : vector<8x16xf32>
    %cst_47 = arith.constant 0.000000e+00 : f32
    %141 = vector.broadcast %cst_47 : f32 to vector<8x16xf32>
    %142 = arith.maximumf %140, %141 : vector<8x16xf32>
    %cst_48 = arith.constant dense<0.000000e+00> : vector<16xf32>
    %143 = vector.multi_reduction <add>, %142, %cst_48 [0] : vector<8x16xf32> to vector<16xf32>
    %144 = vector.shape_cast %143 : vector<16xf32> to vector<1x16xf32>
    %cst_49 = arith.constant 8.000000e+00 : f32
    %145 = vector.broadcast %cst_49 : f32 to vector<1x16xf32>
    %146 = arith.divf %144, %145 : vector<1x16xf32>
    %147 = arith.mulf %142, %142 : vector<8x16xf32>
    %cst_50 = arith.constant dense<0.000000e+00> : vector<16xf32>
    %148 = vector.multi_reduction <add>, %147, %cst_50 [0] : vector<8x16xf32> to vector<16xf32>
    %149 = vector.shape_cast %148 : vector<16xf32> to vector<1x16xf32>
    %cst_51 = arith.constant 8.000000e+00 : f32
    %150 = vector.broadcast %cst_51 : f32 to vector<1x16xf32>
    %151 = arith.divf %149, %150 : vector<1x16xf32>
    %152 = arith.mulf %146, %146 : vector<1x16xf32>
    %153 = arith.subf %151, %152 : vector<1x16xf32>
    %cst_52 = arith.constant 0.000000e+00 : f32
    %154 = vector.broadcast %cst_52 : f32 to vector<1x16xf32>
    %155 = arith.maximumf %153, %154 : vector<1x16xf32>
    %cst_53 = arith.constant 9.99999974E-6 : f32
    %156 = vector.broadcast %cst_53 : f32 to vector<1x16xf32>
    %157 = arith.addf %155, %156 : vector<1x16xf32>
    %158 = math.rsqrt %157 : vector<1x16xf32>
    %159 = arith.mulf %115, %158 : vector<1x16xf32>
    %160 = vector.broadcast %159 : vector<1x16xf32> to vector<8x16xf32>
    %161 = arith.mulf %142, %160 : vector<8x16xf32>
    %162 = arith.mulf %146, %159 : vector<1x16xf32>
    %163 = arith.subf %116, %162 : vector<1x16xf32>
    %164 = vector.broadcast %163 : vector<1x16xf32> to vector<8x16xf32>
    %165 = arith.addf %161, %164 : vector<8x16xf32>
    %c0_54 = arith.constant 0 : index
    %c0_55 = arith.constant 0 : index
    %166 = vector.load %arg7[%c0_54, %c0_55] : memref<8x16xf32, #tpu.memory_space<vmem>>, vector<8x16xf32>
    tpu.vector_store %arg7[%c0_54, %c0_55], %165 {strides = array<i32>} : memref<8x16xf32, #tpu.memory_space<vmem>>, vector<8x16xf32>,
    return
  }
}

</mosaic_0001>

<llo_original>
// kernel: multi_mlp_forward.1
$region0: #{multi_mlp_forward.1}
  #allocation0 [shape = 'u32[]', space=smem, size = 0x4, offset = 0x4, fixed_abs, tag = 'smem constant byte address 0x4 - core index']
  #allocation1 [shape = 'u32[144,128]{1,0:T(1,128)}', space=vmem, size = 0x12000, scoped, tag = 'internal scratch']
  %s0 = inlined_call_operand.vmem [shape: f32[8,32], index: 0, kind: input, shape index: {}]
  %s1 = inlined_call_operand.vmem [shape: f32[32,64], index: 1, kind: input, shape index: {}]
  %s2 = inlined_call_operand.vmem [shape: f32[4,64], index: 2, kind: input, shape index: {}]
  %s3 = inlined_call_operand.vmem [shape: f32[64,48], index: 3, kind: input, shape index: {}]
  %s4 = inlined_call_operand.vmem [shape: f32[4,48], index: 4, kind: input, shape index: {}]
  %s5 = inlined_call_operand.vmem [shape: f32[48,16], index: 5, kind: input, shape index: {}]
  %s6 = inlined_call_operand.vmem [shape: f32[4,16], index: 6, kind: input, shape index: {}]
  %s7 = inlined_call_operand.hbm [shape: f32[8,16], index: 7, kind: output, shape index: {}]
  %s8 = sld [smem:[#allocation0]]
  $region38: #{multi_mlp_forward.1} parent=0
    _
  %s10 = ssub.s32 1, %s8
  %s11 = scalar_select 0, %s10, %s8
  $region1: #{multi_mlp_forward.1} parent=0
    #allocation2 [shape = 'u8[4096]{0}', space=vmem, size = 0x1000, scoped, tag = 'output window, operand 0, single buffered']
    #allocation3 [shape = 's32[1]{0}', space=sflag, size = 0x4, scoped, tag = 'scoped memory for multi_mlp_forward.1']
    %12 = vsyncpa [#allocation3], 0
    // Predicated region
    $region2: #{multi_mlp_forward.1} parent=1 // pred_check
      _
    $region3: #{multi_mlp_forward.1} parent=1 // pred_check_branch
      %14 = sbr.rel (0) target = $region5
    $region4: #{multi_mlp_forward.1} parent=1 // pred_region
      _
    $region5: #{multi_mlp_forward.1} parent=1 // pred_fallthru
      _
    // Predicated region
    $region6: #{multi_mlp_forward.1} parent=1 // pred_check
      _
    $region7: #{multi_mlp_forward.1} parent=1 // pred_check_branch
      %16 = sbr.rel (0) target = $region9
    $region8: #{multi_mlp_forward.1} parent=1 // pred_region
      _
    $region9: #{multi_mlp_forward.1} parent=1 // pred_fallthru
      _
    // Predicated region
    $region10: #{multi_mlp_forward.1} parent=1 // pred_check
      _
    $region11: #{multi_mlp_forward.1} parent=1 // pred_check_branch
      %18 = sbr.rel (0) target = $region13
    $region12: #{multi_mlp_forward.1} parent=1 // pred_region
      _
    $region13: #{multi_mlp_forward.1} parent=1 // pred_fallthru
      _
    // Predicated region
    $region14: #{multi_mlp_forward.1} parent=1 // pred_check
      _
    $region15: #{multi_mlp_forward.1} parent=1 // pred_check_branch
      %20 = sbr.rel (0) target = $region17
    $region16: #{multi_mlp_forward.1} parent=1 // pred_region
      _
    $region17: #{multi_mlp_forward.1} parent=1 // pred_fallthru
      _
    // Predicated region
    $region18: #{multi_mlp_forward.1} parent=1 // pred_check
      _
    $region19: #{multi_mlp_forward.1} parent=1 // pred_check_branch
      %22 = sbr.rel (0) target = $region21
    $region20: #{multi_mlp_forward.1} parent=1 // pred_region
      _
    $region21: #{multi_mlp_forward.1} parent=1 // pred_fallthru
      _
    // Predicated region
    $region22: #{multi_mlp_forward.1} parent=1 // pred_check
      _
    $region23: #{multi_mlp_forward.1} parent=1 // pred_check_branch
      %24 = sbr.rel (0) target = $region25
    $region24: #{multi_mlp_forward.1} parent=1 // pred_region
      _
    $region25: #{multi_mlp_forward.1} parent=1 // pred_fallthru
      _
    // Predicated region
    $region26: #{multi_mlp_forward.1} parent=1 // pred_check
      _
    $region27: #{multi_mlp_forward.1} parent=1 // pred_check_branch
      %26 = sbr.rel (0) target = $region29
    $region28: #{multi_mlp_forward.1} parent=1 // pred_region
      _
    $region29: #{multi_mlp_forward.1} parent=1 // pred_fallthru
      _
    %v27 = vld [vmem:[%s0] sm:$0xff]
    %v28 = vld [vmem:[%s1] sm:$0xff]
    %v29 = vld [vmem:[%s1 + $0x8] sm:$0xff]
    %v30 = vld [vmem:[%s1 + $0x10] sm:$0xff]
    %v31 = vld [vmem:[%s1 + $0x18] sm:$0xff]
    %v32 = vld [vmem:[%s2] sm:$0xf]
    %vm33 = vcmask 261120
    %v35 = vsel %vm33, %v27, 0
    %37 = vmatprep.subr.mxu0 0.0
    %38 = vmatpush1.msra.mxu0 %v28
    %39 = vmatprep.subr.mxu0 0.0
    %40 = vmatpush1.msra.mxu0 %v29
    %41 = vmatprep.subr.mxu0 0.0
    %42 = vmatpush1.msra.mxu0 %v30
    %43 = vmatprep.subr.mxu0 0.0
    %44 = vmatpush1.msra.mxu0 %v31
    %45 = vmatprep.subr.mxu0 0.0
    %46 = vmatpush1.msra.mxu0 0.0
    %47 = vmatprep.subr.mxu0 0.0
    %48 = vmatpush1.msra.mxu0 0.0
    %49 = vmatprep.subr.mxu0 0.0
    %50 = vmatpush1.msra.mxu0 0.0
    %51 = vmatprep.subr.mxu0 0.0
    %52 = vmatpush1.msra.mxu0 0.0
    %53 = vmatprep.subr.mxu0 0.0
    %54 = vmatpush1.msra.mxu0 0.0
    %55 = vmatprep.subr.mxu0 0.0
    %56 = vmatpush1.msra.mxu0 0.0
    %57 = vmatprep.subr.mxu0 0.0
    %58 = vmatpush1.msra.mxu0 0.0
    %59 = vmatprep.subr.mxu0 0.0
    %60 = vmatpush1.msra.mxu0 0.0
    %61 = vmatprep.subr.mxu0 0.0
    %62 = vmatpush1.msra.mxu0 0.0
    %63 = vmatprep.subr.mxu0 0.0
    %64 = vmatpush1.msra.mxu0 0.0
    %65 = vmatprep.subr.mxu0 0.0
    %66 = vmatpush1.msra.mxu0 0.0
    %67 = vmatprep.subr.mxu0 0.0
    %68 = vmatpush1.msra.mxu0 0.0
    %69 = vmatprep.subr.mxu0 0.0
    %70 = vmatpush1.msra.mxu0 0.0
    %71 = vmatprep.subr.mxu0 0.0
    %72 = vmatpush1.msra.mxu0 0.0
    %73 = vmatprep.subr.mxu0 0.0
    %74 = vmatpush1.msra.mxu0 0.0
    %75 = vmatprep.subr.mxu0 0.0
    %76 = vmatpush1.msra.mxu0 0.0
    %77 = vmatprep.subr.mxu0 0.0
    %78 = vmatpush1.msra.mxu0 0.0
    %79 = vmatprep.subr.mxu0 0.0
    %80 = vmatpush1.msra.mxu0 0.0
    %81 = vmatprep.subr.mxu0 0.0
    %82 = vmatpush1.msra.mxu0 0.0
    %83 = vmatprep.subr.mxu0 0.0
    %84 = vmatpush1.msra.mxu0 0.0
    %85 = vmatprep.subr.mxu0 0.0
    %86 = vmatpush1.msra.mxu0 0.0
    %87 = vmatprep.subr.mxu0 0.0
    %88 = vmatpush1.msra.mxu0 0.0
    %89 = vmatprep.subr.mxu0 0.0
    %90 = vmatpush1.msra.mxu0 0.0
    %91 = vmatprep.subr.mxu0 0.0
    %92 = vmatpush1.msra.mxu0 0.0
    %93 = vmatprep.subr.mxu0 0.0
    %94 = vmatpush1.msra.mxu0 0.0
    %95 = vmatprep.subr.mxu0 0.0
    %96 = vmatpush1.msra.mxu0 0.0
    %97 = vmatprep.subr.mxu0 0.0
    %98 = vmatpush1.msra.mxu0 0.0
    %99 = vmatprep.subr.mxu0 0.0
    %100 = vmatpush1.msra.mxu0 0.0
    %101 = vmatprep.mubr.f32.mxu0 0.0
    %102 = vmatmul.mubr.f32.gmra.mrb[0].mxu0 %v35
    %v103 = vpop.f32.mrb[0].mxu0
    %v104 = vadd.f32 0.0, %v103
    %v105 = vpop.f32.mrb[0].mxu0
    %106 = vdwg.mxu0
    %vm107 = vcmask 523264
    %v108 = vsel %vm107, %v104, 0.0
    %v109 = vrot.slane %v108, 4
    %v110 = vadd.f32 %v108, %v109
    %v111 = vrot.slane %v110, 2
    %v112 = vadd.f32 %v110, %v111
    %v113 = vrot.slane %v112, 1
    %v114 = vadd.f32 %v112, %v113
    %v115 = vrcp.pop 8.0
    %v116 = vmul.f32 %v114, %v115
    %v117 = vmul.f32 %v104, %v104
    %v118 = vsel %vm107, %v117, 0.0
    %v119 = vrot.slane %v118, 4
    %v120 = vadd.f32 %v118, %v119
    %v121 = vrot.slane %v120, 2
    %v122 = vadd.f32 %v120, %v121
    %v123 = vrot.slane %v122, 1
    %v124 = vadd.f32 %v122, %v123
    %v125 = vmul.f32 %v124, %v115
    %v126 = vmul.f32 %v116, %v116
    %v127 = vsub.f32 %v125, %v126
    %v128 = vmax.f32 %v127, 0.0
    %v129 = vadd.f32 %v128, 1e-05
    %v130 = vrsqrt.pop %v129
    %v131 = vmul.f32 %v32, %v130
    %v132 = vlaneseq
    %v133 = vshrl.u32 %v132, 7
    %v134 = vsub.s32 0, %v133
    %v135 = vrot.slane %v131, %v134
    %v136 = vmul.f32 %v104, %v135
    %v137 = vmul.f32 %v116, %v131
    %v139 = vrot.slane %v137, 7
    %v141 = vsub.f32 %v32, %v139
    %v142 = vlaneseq
    %v143 = vshrl.u32 %v142, 7
    %v144 = vsub.s32 1, %v143
    %v145 = vrot.slane %v141, %v144
    %v146 = vadd.f32 %v136, %v145
    %v147 = vmax.f32 %v146, 0.0
    %v148 = vsel %vm107, %v147, 0.0
    %v149 = vrot.slane %v148, 4
    %v150 = vadd.f32 %v148, %v149
    %v151 = vrot.slane %v150, 2
    %v152 = vadd.f32 %v150, %v151
    %v153 = vrot.slane %v152, 1
    %v154 = vadd.f32 %v152, %v153
    %v155 = vmul.f32 %v154, %v115
    %v156 = vmul.f32 %v147, %v147
    %v157 = vsel %vm107, %v156, 0.0
    %v158 = vrot.slane %v157, 4
    %v159 = vadd.f32 %v157, %v158
    %v160 = vrot.slane %v159, 2
    %v161 = vadd.f32 %v159, %v160
    %v162 = vrot.slane %v161, 1
    %v163 = vadd.f32 %v161, %v162
    %v164 = vmul.f32 %v163, %v115
    %v165 = vmul.f32 %v155, %v155
    %v166 = vsub.f32 %v164, %v165
    %v167 = vmax.f32 %v166, 0.0
    %v168 = vadd.f32 %v167, 1e-05
    %v169 = vrsqrt.pop %v168
    %v170 = vmul.f32 %v32, %v169
    %v171 = vlaneseq
    %v172 = vshrl.u32 %v171, 7
    %v173 = vsub.s32 2, %v172
    %v174 = vrot.slane %v170, %v173
    %v175 = vmul.f32 %v147, %v174
    %v176 = vmul.f32 %v155, %v170
    %v178 = vrot.slane %v176, 7
    %v180 = vsub.f32 %v32, %v178
    %v181 = vlaneseq
    %v182 = vshrl.u32 %v181, 7
    %v183 = vsub.s32 3, %v182
    %v184 = vrot.slane %v180, %v183
    %v185 = vadd.f32 %v175, %v184
    %v186 = vld [vmem:[%s3] sm:$0xff]
    %v187 = vld [vmem:[%s3 + $0x8] sm:$0xff]
    %v188 = vld [vmem:[%s3 + $0x10] sm:$0xff]
    %v189 = vld [vmem:[%s3 + $0x18] sm:$0xff]
    %v190 = vld [vmem:[%s3 + $0x20] sm:$0xff]
    %v191 = vld [vmem:[%s3 + $0x28] sm:$0xff]
    %v192 = vld [vmem:[%s3 + $0x30] sm:$0xff]
    %v193 = vld [vmem:[%s3 + $0x38] sm:$0xff]
    %v194 = vld [vmem:[%s4] sm:$0xf]
    %v196 = vsel %vm107, %v185, 0
    %198 = vmatprep.subr.mxu0 0.0
    %199 = vmatpush1.msra.mxu0 %v186
    %200 = vmatprep.subr.mxu0 0.0
    %201 = vmatpush1.msra.mxu0 %v187
    %202 = vmatprep.subr.mxu0 0.0
    %203 = vmatpush1.msra.mxu0 %v188
    %204 = vmatprep.subr.mxu0 0.0
    %205 = vmatpush1.msra.mxu0 %v189
    %206 = vmatprep.subr.mxu0 0.0
    %207 = vmatpush1.msra.mxu0 %v190
    %208 = vmatprep.subr.mxu0 0.0
    %209 = vmatpush1.msra.mxu0 %v191
    %210 = vmatprep.subr.mxu0 0.0
    %211 = vmatpush1.msra.mxu0 %v192
    %212 = vmatprep.subr.mxu0 0.0
    %213 = vmatpush1.msra.mxu0 %v193
    %214 = vmatprep.subr.mxu0 0.0
    %215 = vmatpush1.msra.mxu0 0.0
    %216 = vmatprep.subr.mxu0 0.0
    %217 = vmatpush1.msra.mxu0 0.0
    %218 = vmatprep.subr.mxu0 0.0
    %219 = vmatpush1.msra.mxu0 0.0
    %220 = vmatprep.subr.mxu0 0.0
    %221 = vmatpush1.msra.mxu0 0.0
    %222 = vmatprep.subr.mxu0 0.0
    %223 = vmatpush1.msra.mxu0 0.0
    %224 = vmatprep.subr.mxu0 0.0
    %225 = vmatpush1.msra.mxu0 0.0
    %226 = vmatprep.subr.mxu0 0.0
    %227 = vmatpush1.msra.mxu0 0.0
    %228 = vmatprep.subr.mxu0 0.0
    %229 = vmatpush1.msra.mxu0 0.0
    %230 = vmatprep.subr.mxu0 0.0
    %231 = vmatpush1.msra.mxu0 0.0
    %232 = vmatprep.subr.mxu0 0.0
    %233 = vmatpush1.msra.mxu0 0.0
    %234 = vmatprep.subr.mxu0 0.0
    %235 = vmatpush1.msra.mxu0 0.0
    %236 = vmatprep.subr.mxu0 0.0
    %237 = vmatpush1.msra.mxu0 0.0
    %238 = vmatprep.subr.mxu0 0.0
    %239 = vmatpush1.msra.mxu0 0.0
    %240 = vmatprep.subr.mxu0 0.0
    %241 = vmatpush1.msra.mxu0 0.0
    %242 = vmatprep.subr.mxu0 0.0
    %243 = vmatpush1.msra.mxu0 0.0
    %244 = vmatprep.subr.mxu0 0.0
    %245 = vmatpush1.msra.mxu0 0.0
    %246 = vmatprep.subr.mxu0 0.0
    %247 = vmatpush1.msra.mxu0 0.0
    %248 = vmatprep.subr.mxu0 0.0
    %249 = vmatpush1.msra.mxu0 0.0
    %250 = vmatprep.subr.mxu0 0.0
    %251 = vmatpush1.msra.mxu0 0.0
    %252 = vmatprep.subr.mxu0 0.0
    %253 = vmatpush1.msra.mxu0 0.0
    %254 = vmatprep.subr.mxu0 0.0
    %255 = vmatpush1.msra.mxu0 0.0
    %256 = vmatprep.subr.mxu0 0.0
    %257 = vmatpush1.msra.mxu0 0.0
    %258 = vmatprep.subr.mxu0 0.0
    %259 = vmatpush1.msra.mxu0 0.0
    %260 = vmatprep.subr.mxu0 0.0
    %261 = vmatpush1.msra.mxu0 0.0
    %262 = vmatprep.mubr.f32.mxu0 0.0
    %263 = vmatmul.mubr.f32.gmra.mrb[0].mxu0 %v196
    %v264 = vpop.f32.mrb[0].mxu0
    %v265 = vadd.f32 0.0, %v264
    %v266 = vpop.f32.mrb[0].mxu0
    %267 = vdwg.mxu0
    %vm268 = vcmask 392192
    %v269 = vsel %vm268, %v265, 0.0
    %v270 = vrot.slane %v269, 4
    %v271 = vadd.f32 %v269, %v270
    %v272 = vrot.slane %v271, 2
    %v273 = vadd.f32 %v271, %v272
    %v274 = vrot.slane %v273, 1
    %v275 = vadd.f32 %v273, %v274
    %v276 = vmul.f32 %v275, %v115
    %v277 = vmul.f32 %v265, %v265
    %v278 = vsel %vm268, %v277, 0.0
    %v279 = vrot.slane %v278, 4
    %v280 = vadd.f32 %v278, %v279
    %v281 = vrot.slane %v280, 2
    %v282 = vadd.f32 %v280, %v281
    %v283 = vrot.slane %v282, 1
    %v284 = vadd.f32 %v282, %v283
    %v285 = vmul.f32 %v284, %v115
    %v286 = vmul.f32 %v276, %v276
    %v287 = vsub.f32 %v285, %v286
    %v288 = vmax.f32 %v287, 0.0
    %v289 = vadd.f32 %v288, 1e-05
    %v290 = vrsqrt.pop %v289
    %v291 = vmul.f32 %v194, %v290
    %v292 = vlaneseq
    %v293 = vshrl.u32 %v292, 7
    %v294 = vsub.s32 0, %v293
    %v295 = vrot.slane %v291, %v294
    %v296 = vmul.f32 %v265, %v295
    %v297 = vmul.f32 %v276, %v291
    %v299 = vrot.slane %v297, 7
    %v301 = vsub.f32 %v194, %v299
    %v302 = vlaneseq
    %v303 = vshrl.u32 %v302, 7
    %v304 = vsub.s32 1, %v303
    %v305 = vrot.slane %v301, %v304
    %v306 = vadd.f32 %v296, %v305
    %v307 = vmax.f32 %v306, 0.0
    %v308 = vsel %vm268, %v307, 0.0
    %v309 = vrot.slane %v308, 4
    %v310 = vadd.f32 %v308, %v309
    %v311 = vrot.slane %v310, 2
    %v312 = vadd.f32 %v310, %v311
    %v313 = vrot.slane %v312, 1
    %v314 = vadd.f32 %v312, %v313
    %v315 = vmul.f32 %v314, %v115
    %v316 = vmul.f32 %v307, %v307
    %v317 = vsel %vm268, %v316, 0.0
    %v318 = vrot.slane %v317, 4
    %v319 = vadd.f32 %v317, %v318
    %v320 = vrot.slane %v319, 2
    %v321 = vadd.f32 %v319, %v320
    %v322 = vrot.slane %v321, 1
    %v323 = vadd.f32 %v321, %v322
    %v324 = vmul.f32 %v323, %v115
    %v325 = vmul.f32 %v315, %v315
    %v326 = vsub.f32 %v324, %v325
    %v327 = vmax.f32 %v326, 0.0
    %v328 = vadd.f32 %v327, 1e-05
    %v329 = vrsqrt.pop %v328
    %v330 = vmul.f32 %v194, %v329
    %v331 = vlaneseq
    %v332 = vshrl.u32 %v331, 7
    %v333 = vsub.s32 2, %v332
    %v334 = vrot.slane %v330, %v333
    %v335 = vmul.f32 %v307, %v334
    %v336 = vmul.f32 %v315, %v330
    %v338 = vrot.slane %v336, 7
    %v340 = vsub.f32 %v194, %v338
    %v341 = vlaneseq
    %v342 = vshrl.u32 %v341, 7
    %v343 = vsub.s32 3, %v342
    %v344 = vrot.slane %v340, %v343
    %v345 = vadd.f32 %v335, %v344
    %v346 = vld [vmem:[%s5] sm:$0xff]
    %v347 = vld [vmem:[%s5 + $0x8] sm:$0xff]
    %v348 = vld [vmem:[%s5 + $0x10] sm:$0xff]
    %v349 = vld [vmem:[%s5 + $0x18] sm:$0xff]
    %v350 = vld [vmem:[%s5 + $0x20] sm:$0xff]
    %v351 = vld [vmem:[%s5 + $0x28] sm:$0xff]
    %v352 = vld [vmem:[%s6] sm:$0xf]
    %v354 = vsel %vm268, %v345, 0
    %356 = vmatprep.subr.mxu0 0.0
    %357 = vmatpush1.msra.mxu0 %v346
    %358 = vmatprep.subr.mxu0 0.0
    %359 = vmatpush1.msra.mxu0 %v347
    %360 = vmatprep.subr.mxu0 0.0
    %361 = vmatpush1.msra.mxu0 %v348
    %362 = vmatprep.subr.mxu0 0.0
    %363 = vmatpush1.msra.mxu0 %v349
    %364 = vmatprep.subr.mxu0 0.0
    %365 = vmatpush1.msra.mxu0 %v350
    %366 = vmatprep.subr.mxu0 0.0
    %367 = vmatpush1.msra.mxu0 %v351
    %368 = vmatprep.subr.mxu0 0.0
    %369 = vmatpush1.msra.mxu0 0.0
    %370 = vmatprep.subr.mxu0 0.0
    %371 = vmatpush1.msra.mxu0 0.0
    %372 = vmatprep.subr.mxu0 0.0
    %373 = vmatpush1.msra.mxu0 0.0
    %374 = vmatprep.subr.mxu0 0.0
    %375 = vmatpush1.msra.mxu0 0.0
    %376 = vmatprep.subr.mxu0 0.0
    %377 = vmatpush1.msra.mxu0 0.0
    %378 = vmatprep.subr.mxu0 0.0
    %379 = vmatpush1.msra.mxu0 0.0
    %380 = vmatprep.subr.mxu0 0.0
    %381 = vmatpush1.msra.mxu0 0.0
    %382 = vmatprep.subr.mxu0 0.0
    %383 = vmatpush1.msra.mxu0 0.0
    %384 = vmatprep.subr.mxu0 0.0
    %385 = vmatpush1.msra.mxu0 0.0
    %386 = vmatprep.subr.mxu0 0.0
    %387 = vmatpush1.msra.mxu0 0.0
    %388 = vmatprep.subr.mxu0 0.0
    %389 = vmatpush1.msra.mxu0 0.0
    %390 = vmatprep.subr.mxu0 0.0
    %391 = vmatpush1.msra.mxu0 0.0
    %392 = vmatprep.subr.mxu0 0.0
    %393 = vmatpush1.msra.mxu0 0.0
    %394 = vmatprep.subr.mxu0 0.0
    %395 = vmatpush1.msra.mxu0 0.0
    %396 = vmatprep.subr.mxu0 0.0
    %397 = vmatpush1.msra.mxu0 0.0
    %398 = vmatprep.subr.mxu0 0.0
    %399 = vmatpush1.msra.mxu0 0.0
    %400 = vmatprep.subr.mxu0 0.0
    %401 = vmatpush1.msra.mxu0 0.0
    %402 = vmatprep.subr.mxu0 0.0
    %403 = vmatpush1.msra.mxu0 0.0
    %404 = vmatprep.subr.mxu0 0.0
    %405 = vmatpush1.msra.mxu0 0.0
    %406 = vmatprep.subr.mxu0 0.0
    %407 = vmatpush1.msra.mxu0 0.0
    %408 = vmatprep.subr.mxu0 0.0
    %409 = vmatpush1.msra.mxu0 0.0
    %410 = vmatprep.subr.mxu0 0.0
    %411 = vmatpush1.msra.mxu0 0.0
    %412 = vmatprep.subr.mxu0 0.0
    %413 = vmatpush1.msra.mxu0 0.0
    %414 = vmatprep.subr.mxu0 0.0
    %415 = vmatpush1.msra.mxu0 0.0
    %416 = vmatprep.subr.mxu0 0.0
    %417 = vmatpush1.msra.mxu0 0.0
    %418 = vmatprep.subr.mxu0 0.0
    %419 = vmatpush1.msra.mxu0 0.0
    %420 = vmatprep.mubr.f32.mxu0 0.0
    %421 = vmatmul.mubr.f32.gmra.mrb[0].mxu0 %v354
    %v422 = vpop.f32.mrb[0].mxu0
    %v423 = vadd.f32 0.0, %v422
    %v424 = vpop.f32.mrb[0].mxu0
    %425 = vdwg.mxu0
    %vm426 = vcmask 130048
    %v427 = vsel %vm426, %v423, 0.0
    %v428 = vrot.slane %v427, 4
    %v429 = vadd.f32 %v427, %v428
    %v430 = vrot.slane %v429, 2
    %v431 = vadd.f32 %v429, %v430
    %v432 = vrot.slane %v431, 1
    %v433 = vadd.f32 %v431, %v432
    %v434 = vmul.f32 %v433, %v115
    %v435 = vmul.f32 %v423, %v423
    %v436 = vsel %vm426, %v435, 0.0
    %v437 = vrot.slane %v436, 4
    %v438 = vadd.f32 %v436, %v437
    %v439 = vrot.slane %v438, 2
    %v440 = vadd.f32 %v438, %v439
    %v441 = vrot.slane %v440, 1
    %v442 = vadd.f32 %v440, %v441
    %v443 = vmul.f32 %v442, %v115
    %v444 = vmul.f32 %v434, %v434
    %v445 = vsub.f32 %v443, %v444
    %v446 = vmax.f32 %v445, 0.0
    %v447 = vadd.f32 %v446, 1e-05
    %v448 = vrsqrt.pop %v447
    %v449 = vmul.f32 %v352, %v448
    %v450 = vlaneseq
    %v451 = vshrl.u32 %v450, 7
    %v452 = vsub.s32 0, %v451
    %v453 = vrot.slane %v449, %v452
    %v454 = vmul.f32 %v423, %v453
    %v455 = vmul.f32 %v434, %v449
    %v457 = vrot.slane %v455, 7
    %v459 = vsub.f32 %v352, %v457
    %v460 = vlaneseq
    %v461 = vshrl.u32 %v460, 7
    %v462 = vsub.s32 1, %v461
    %v463 = vrot.slane %v459, %v462
    %v464 = vadd.f32 %v454, %v463
    %v465 = vmax.f32 %v464, 0.0
    %v466 = vsel %vm426, %v465, 0.0
    %v467 = vrot.slane %v466, 4
    %v468 = vadd.f32 %v466, %v467
    %v469 = vrot.slane %v468, 2
    %v470 = vadd.f32 %v468, %v469
    %v471 = vrot.slane %v470, 1
    %v472 = vadd.f32 %v470, %v471
    %v473 = vmul.f32 %v472, %v115
    %v474 = vmul.f32 %v465, %v465
    %v475 = vsel %vm426, %v474, 0.0
    %v476 = vrot.slane %v475, 4
    %v477 = vadd.f32 %v475, %v476
    %v478 = vrot.slane %v477, 2
    %v479 = vadd.f32 %v477, %v478
    %v480 = vrot.slane %v479, 1
    %v481 = vadd.f32 %v479, %v480
    %v482 = vmul.f32 %v481, %v115
    %v483 = vmul.f32 %v473, %v473
    %v484 = vsub.f32 %v482, %v483
    %v485 = vmax.f32 %v484, 0.0
    %v486 = vadd.f32 %v485, 1e-05
    %v487 = vrsqrt.pop %v486
    %v488 = vmul.f32 %v352, %v487
    %v489 = vlaneseq
    %v490 = vshrl.u32 %v489, 7
    %v491 = vsub.s32 2, %v490
    %v492 = vrot.slane %v488, %v491
    %v493 = vmul.f32 %v465, %v492
    %v494 = vmul.f32 %v473, %v488
    %v496 = vrot.slane %v494, 7
    %v498 = vsub.f32 %v352, %v496
    %v499 = vlaneseq
    %v500 = vshrl.u32 %v499, 7
    %v501 = vsub.s32 3, %v500
    %v502 = vrot.slane %v498, %v501
    %v503 = vadd.f32 %v493, %v502
    %504 = vst.msk [vmem:[#allocation2] sm:$0xff] %vm426, %v503
    // Predicated region
    $region30: #{multi_mlp_forward.1} parent=1 // pred_check
      _
    $region31: #{multi_mlp_forward.1} parent=1 // pred_check_branch
      %506 = sbr.rel (0) target = $region33
    $region32: #{multi_mlp_forward.1} parent=1 // pred_region
      %s508 = ssub.s32 128, 128
      %509 = vsyncadd [#allocation3], %s508
      %s511 = sshll.u32 [#allocation2], 4
      %s512 = int_to_ptr.vmem [resolvable:$true] %s511
      %514 = dma.vmem_to_hbm [thread:$0]  %s512, 128, %s7, [#allocation3]
    $region33: #{multi_mlp_forward.1} parent=1 // pred_fallthru
      _
    // Predicated region
    $region34: #{multi_mlp_forward.1} parent=1 // pred_check
      _
    $region35: #{multi_mlp_forward.1} parent=1 // pred_check_branch
      %516 = sbr.rel (0) target = $region37
    $region36: #{multi_mlp_forward.1} parent=1 // pred_region
      %517 = dma.done [#allocation3], 128
    $region37: #{multi_mlp_forward.1} parent=1 // pred_fallthru
      _
    %518 = vsyncpa [#allocation3], 1

</llo_original>
